<compile_context>
chip_gen: v7x
topology: tpu7x:2x2x1
jax: 0.10.0
libtpu: 0.0.40
codegen_flags: <defaults>
</compile_context>

<pallas_src>
import jax
import jax.numpy as jnp
from jax.experimental import pallas as pl
from jax.experimental.pallas import tpu as pltpu

IN_FEATURES = 5
OUT_FEATURES = 10
MAX_BATCH_TILE = 1024


def linear_kernel(x_ref, wb_ref, o_ref):
    """o = x @ W + b for one batch tile.

    x_ref:  (TB, 5)
    wb_ref: (6, 10)  -- rows 0..4 = weight (already transposed), row 5 = bias
    o_ref:  (TB, 10)
    """
    x = x_ref[...].astype(jnp.float32)            # (TB, 5)
    wb = wb_ref[...].astype(jnp.float32)          # (6, 10) -- single vreg tile
    w = wb[:IN_FEATURES, :]                       # (5, 10)
    b = wb[IN_FEATURES:IN_FEATURES + 1, :]        # (1, 10)
    acc = jnp.dot(x, w, preferred_element_type=jnp.float32) + b
    o_ref[...] = acc.astype(o_ref.dtype)


def init_linear_params(key, in_features=IN_FEATURES, out_features=OUT_FEATURES,
                       dtype=jnp.float32):
    """PyTorch-style uniform init, stored in the fused kernel-ready layout.

    Returns wb of shape (in_features + 1, out_features):
      wb[:in_features, :] = weight.T   (so kernel does x @ wb[:K])
      wb[in_features, :]  = bias
    """
    k_w, k_b = jax.random.split(key)
    bound = 1.0 / jnp.sqrt(jnp.float32(in_features))
    weight_t = jax.random.uniform(
        k_w, (in_features, out_features), dtype, -bound, bound)
    bias = jax.random.uniform(k_b, (1, out_features), dtype, -bound, bound)
    return jnp.concatenate([weight_t, bias], axis=0)   # (6, 10)


@jax.jit
def linear_forward(x, wb):
    """Equivalent to torch.nn.Linear(5, 10)(x) with
    weight = wb[:5].T and bias = wb[5]."""
    B = x.shape[0]
    out_features = wb.shape[1]
    in_features_p1 = wb.shape[0]

    # Batch tile: full batch if small, else 1024-row tiles (multiple of the
    # 8-row f32 sublane); grid handles any ragged last tile.
    TB = B if B <= MAX_BATCH_TILE else MAX_BATCH_TILE
    grid = (pl.cdiv(B, TB),)

    return pl.pallas_call(
        linear_kernel,
        out_shape=jax.ShapeDtypeStruct((B, out_features), x.dtype),
        grid=grid,
        in_specs=[
            pl.BlockSpec((TB, IN_FEATURES), lambda i: (i, 0)),          # x tile
            pl.BlockSpec((in_features_p1, out_features), lambda i: (0, 0)),  # fused W+b
        ],
        out_specs=pl.BlockSpec((TB, out_features), lambda i: (i, 0)),
        compiler_params=pltpu.CompilerParams(
            dimension_semantics=("parallel",),       # v7x: both TCs split batch
            vmem_limit_bytes=32 * 1024 * 1024,       # per-tile footprint ~2 MiB
        ),
    )(x, wb)


def m_forward(x, wb):
    # Reproduces m.forward: returns (Linear(x), 2). The constant 2 stays a
    # Python int, exactly as in the PyTorch module.
    return linear_forward(x, wb), 2


if __name__ == "__main__":
    key = jax.random.PRNGKey(0)
    k_x, k_p = jax.random.split(key)

    batch = 8  # one full f32 sublane tile
    wb = init_linear_params(k_p)
    x = jax.random.normal(k_x, (batch, IN_FEATURES), jnp.float32)

    out, two = m_forward(x, wb)
    out = jax.block_until_ready(out)

    # Sanity check vs. plain JAX reference.
    ref = x @ wb[:IN_FEATURES, :] + wb[IN_FEATURES:IN_FEATURES + 1, :]
    assert out.shape == (batch, OUT_FEATURES)
    assert two == 2
    assert jnp.allclose(out, ref, atol=1e-5, rtol=1e-5)

    print("KERNEL_OK")
</pallas_src>

<mosaic_0001>
module attributes {stable_mosaic.version = 11 : i64} {
  func.func @linear_kernel(%arg0: i32, %arg1: memref<8x5xf32, #tpu.memory_space<vmem>>, %arg2: memref<6x10xf32, #tpu.memory_space<vmem>>, %arg3: memref<8x10xf32, #tpu.memory_space<vmem>>) attributes {dimension_semantics = [#tpu.dimension_semantics<parallel>], iteration_bounds = array<i64: 1>, scalar_prefetch = 0 : i64, scratch_operands = 0 : i64, tpu.core_type = #tpu.core_type<tc>, window_params = [{transform_indices = @transform_0, window_bounds = array<i64: 8, 5>}, {pipeline_mode = #tpu.pipeline_mode<synchronous>, transform_indices = @transform_1, window_bounds = array<i64: 6, 10>}, {transform_indices = @transform_2, window_bounds = array<i64: 8, 10>}]} {
    %c0 = arith.constant 0 : index
    %c0_0 = arith.constant 0 : index
    %0 = vector.load %arg1[%c0, %c0_0] : memref<8x5xf32, #tpu.memory_space<vmem>>, vector<8x5xf32>
    %c0_1 = arith.constant 0 : index
    %c0_2 = arith.constant 0 : index
    %1 = vector.load %arg2[%c0_1, %c0_2] : memref<6x10xf32, #tpu.memory_space<vmem>>, vector<6x10xf32>
    %2 = vector.extract_strided_slice %1 {offsets = [0, 0], sizes = [5, 10], strides = [1, 1]} : vector<6x10xf32> to vector<5x10xf32>
    %3 = vector.extract_strided_slice %1 {offsets = [5, 0], sizes = [1, 10], strides = [1, 1]} : vector<6x10xf32> to vector<1x10xf32>
    %cst = arith.constant dense<0.000000e+00> : vector<8x10xf32>
    %4 = tpu.matmul %0, %2, %cst {dimension_numbers = #tpu.dot_dimension_numbers<[1], [0], [0], [1], [0, 0, 1, 1], [], []>} : vector<8x5xf32>, vector<5x10xf32>, vector<8x10xf32> -> vector<8x10xf32>
    %5 = vector.broadcast %3 : vector<1x10xf32> to vector<8x10xf32>
    %6 = arith.addf %4, %5 : vector<8x10xf32>
    %c0_3 = arith.constant 0 : index
    %c0_4 = arith.constant 0 : index
    %7 = vector.load %arg3[%c0_3, %c0_4] : memref<8x10xf32, #tpu.memory_space<vmem>>, vector<8x10xf32>
    tpu.vector_store %arg3[%c0_3, %c0_4], %6 {strides = array<i32>} : memref<8x10xf32, #tpu.memory_space<vmem>>, vector<8x10xf32>,
    return
  }
  func.func @transform_0(%arg0: i32) -> (i32, i32) {
    %c0_i32 = arith.constant 0 : i32
    %c0_i32_0 = arith.constant 0 : i32
    return %arg0, %c0_i32 : i32, i32
  }
  func.func @transform_1(%arg0: i32) -> (i32, i32) {
    %c0_i32 = arith.constant 0 : i32
    %c0_i32_0 = arith.constant 0 : i32
    %c0_i32_1 = arith.constant 0 : i32
    return %c0_i32, %c0_i32_0 : i32, i32
  }
  func.func @transform_2(%arg0: i32) -> (i32, i32) {
    %c0_i32 = arith.constant 0 : i32
    %c0_i32_0 = arith.constant 0 : i32
    return %arg0, %c0_i32 : i32, i32
  }
}

</mosaic_0001>

<llo_original>
// kernel: linear_forward.1
$region0: #{linear_forward.1}
  #allocation0 [shape = 'u32[]', space=smem, size = 0x4, offset = 0x4, fixed_abs, tag = 'smem constant byte address 0x4 - core index']
  #allocation1 [shape = 'u32[144,128]{1,0:T(1,128)}', space=vmem, size = 0x12000, scoped, tag = 'internal scratch']
  %s0 = inlined_call_operand.hbm [shape: f32[8,5], index: 0, kind: input, shape index: {}]
  %s1 = inlined_call_operand.hbm [shape: f32[6,10], index: 1, kind: input, shape index: {}]
  %s2 = inlined_call_operand.hbm [shape: f32[8,10], index: 2, kind: output, shape index: {}]
  %s3 = sld [smem:[#allocation0]]
  $region26: #{linear_forward.1} parent=0
    _
  %s5 = ssub.s32 1, %s3
  %s6 = scalar_select 0, %s5, %s3
  $region1: #{linear_forward.1} parent=0
    #allocation2 [shape = 'u8[4096]{0}', space=vmem, size = 0x1000, scoped, tag = 'input window, operand 0, single buffered']
    #allocation3 [shape = 's32[1]{0}', space=sflag, size = 0x4, scoped, tag = 'scoped memory for linear_forward.1']
    #allocation4 [shape = 's32[1]{0}', space=sflag, size = 0x4, scoped, tag = 'scoped memory for linear_forward.1']
    #allocation5 [shape = 'u8[4096]{0}', space=vmem, size = 0x1000, scoped, tag = 'input window, operand 1, single buffered']
    #allocation6 [shape = 's32[1]{0}', space=sflag, size = 0x4, scoped, tag = 'scoped memory for linear_forward.1']
    #allocation7 [shape = 'u8[4096]{0}', space=vmem, size = 0x1000, scoped, tag = 'output window, operand 0, single buffered']
    %7 = vsyncpa [#allocation3], 0
    %8 = vsyncpa [#allocation6], 0
    %9 = vsyncpa [#allocation4], 0
    // Predicated region
    $region2: #{linear_forward.1} parent=1 // pred_check
      _
    $region3: #{linear_forward.1} parent=1 // pred_check_branch
      %11 = sbr.rel (0) target = $region5
    $region4: #{linear_forward.1} parent=1 // pred_region
      %s13 = ssub.s32 128, 128
      %14 = vsyncadd [#allocation3], %s13
      %s16 = sshll.u32 [#allocation2], 4
      %s17 = int_to_ptr.vmem [resolvable:$true] %s16
      %19 = dma.hbm_to_vmem [thread:$0]  %s0, 128, %s17, [#allocation3]
    $region5: #{linear_forward.1} parent=1 // pred_fallthru
      _
    // Predicated region
    $region6: #{linear_forward.1} parent=1 // pred_check
      _
    $region7: #{linear_forward.1} parent=1 // pred_check_branch
      %21 = sbr.rel (0) target = $region9
    $region8: #{linear_forward.1} parent=1 // pred_region
      %s23 = ssub.s32 128, 128
      %24 = vsyncadd [#allocation6], %s23
      %s26 = sshll.u32 [#allocation5], 4
      %s27 = int_to_ptr.vmem [resolvable:$true] %s26
      %29 = dma.hbm_to_vmem [thread:$0]  %s1, 128, %s27, [#allocation6]
    $region9: #{linear_forward.1} parent=1 // pred_fallthru
      _
    // Predicated region
    $region10: #{linear_forward.1} parent=1 // pred_check
      _
    $region11: #{linear_forward.1} parent=1 // pred_check_branch
      %31 = sbr.rel (0) target = $region13
    $region12: #{linear_forward.1} parent=1 // pred_region
      %32 = dma.done [#allocation3], 128
    $region13: #{linear_forward.1} parent=1 // pred_fallthru
      _
    // Predicated region
    $region14: #{linear_forward.1} parent=1 // pred_check
      _
    $region15: #{linear_forward.1} parent=1 // pred_check_branch
      %34 = sbr.rel (0) target = $region17
    $region16: #{linear_forward.1} parent=1 // pred_region
      %35 = dma.done [#allocation6], 128
    $region17: #{linear_forward.1} parent=1 // pred_fallthru
      _
    %v36 = vld [vmem:[#allocation2] sm:$0xff]
    %v37 = vld [vmem:[#allocation5] sm:$0x3f]
    %v38 = vlaneseq
    %v39 = vshrl.u32 %v38, 7
    %v40 = vsub.s32 5, %v39
    %v41 = vrot.slane %v37, %v40
    %vm42 = vcmask 39936
    %v44 = vsel %vm42, %v36, 0
    %vm46 = vcmask 1044480
    %v48 = vsel %vm46, %v37, 0
    %50 = vmatprep.subr.mxu0 0.0
    %51 = vmatpush1.msra.mxu0 %v48
    %52 = vmatprep.subr.mxu0 0.0
    %53 = vmatpush1.msra.mxu0 0.0
    %54 = vmatprep.subr.mxu0 0.0
    %55 = vmatpush1.msra.mxu0 0.0
    %56 = vmatprep.subr.mxu0 0.0
    %57 = vmatpush1.msra.mxu0 0.0
    %58 = vmatprep.subr.mxu0 0.0
    %59 = vmatpush1.msra.mxu0 0.0
    %60 = vmatprep.subr.mxu0 0.0
    %61 = vmatpush1.msra.mxu0 0.0
    %62 = vmatprep.subr.mxu0 0.0
    %63 = vmatpush1.msra.mxu0 0.0
    %64 = vmatprep.subr.mxu0 0.0
    %65 = vmatpush1.msra.mxu0 0.0
    %66 = vmatprep.subr.mxu0 0.0
    %67 = vmatpush1.msra.mxu0 0.0
    %68 = vmatprep.subr.mxu0 0.0
    %69 = vmatpush1.msra.mxu0 0.0
    %70 = vmatprep.subr.mxu0 0.0
    %71 = vmatpush1.msra.mxu0 0.0
    %72 = vmatprep.subr.mxu0 0.0
    %73 = vmatpush1.msra.mxu0 0.0
    %74 = vmatprep.subr.mxu0 0.0
    %75 = vmatpush1.msra.mxu0 0.0
    %76 = vmatprep.subr.mxu0 0.0
    %77 = vmatpush1.msra.mxu0 0.0
    %78 = vmatprep.subr.mxu0 0.0
    %79 = vmatpush1.msra.mxu0 0.0
    %80 = vmatprep.subr.mxu0 0.0
    %81 = vmatpush1.msra.mxu0 0.0
    %82 = vmatprep.subr.mxu0 0.0
    %83 = vmatpush1.msra.mxu0 0.0
    %84 = vmatprep.subr.mxu0 0.0
    %85 = vmatpush1.msra.mxu0 0.0
    %86 = vmatprep.subr.mxu0 0.0
    %87 = vmatpush1.msra.mxu0 0.0
    %88 = vmatprep.subr.mxu0 0.0
    %89 = vmatpush1.msra.mxu0 0.0
    %90 = vmatprep.subr.mxu0 0.0
    %91 = vmatpush1.msra.mxu0 0.0
    %92 = vmatprep.subr.mxu0 0.0
    %93 = vmatpush1.msra.mxu0 0.0
    %94 = vmatprep.subr.mxu0 0.0
    %95 = vmatpush1.msra.mxu0 0.0
    %96 = vmatprep.subr.mxu0 0.0
    %97 = vmatpush1.msra.mxu0 0.0
    %98 = vmatprep.subr.mxu0 0.0
    %99 = vmatpush1.msra.mxu0 0.0
    %100 = vmatprep.subr.mxu0 0.0
    %101 = vmatpush1.msra.mxu0 0.0
    %102 = vmatprep.subr.mxu0 0.0
    %103 = vmatpush1.msra.mxu0 0.0
    %104 = vmatprep.subr.mxu0 0.0
    %105 = vmatpush1.msra.mxu0 0.0
    %106 = vmatprep.subr.mxu0 0.0
    %107 = vmatpush1.msra.mxu0 0.0
    %108 = vmatprep.subr.mxu0 0.0
    %109 = vmatpush1.msra.mxu0 0.0
    %110 = vmatprep.subr.mxu0 0.0
    %111 = vmatpush1.msra.mxu0 0.0
    %112 = vmatprep.subr.mxu0 0.0
    %113 = vmatpush1.msra.mxu0 0.0
    %114 = vmatprep.mubr.f32.mxu0 0.0
    %115 = vmatmul.mubr.f32.gmra.mrb[0].mxu0 %v44
    %v116 = vpop.f32.mrb[0].mxu0
    %v117 = vadd.f32 %v41, %v116
    %v118 = vpop.f32.mrb[0].mxu0
    %119 = vdwg.mxu0
    %vm120 = vcmask 80896
    %121 = vst.msk [vmem:[#allocation7] sm:$0xff] %vm120, %v117
    // Predicated region
    $region18: #{linear_forward.1} parent=1 // pred_check
      _
    $region19: #{linear_forward.1} parent=1 // pred_check_branch
      %123 = sbr.rel (0) target = $region21
    $region20: #{linear_forward.1} parent=1 // pred_region
      %s125 = ssub.s32 128, 128
      %126 = vsyncadd [#allocation4], %s125
      %s128 = sshll.u32 [#allocation7], 4
      %s129 = int_to_ptr.vmem [resolvable:$true] %s128
      %131 = dma.vmem_to_hbm [thread:$0]  %s129, 128, %s2, [#allocation4]
    $region21: #{linear_forward.1} parent=1 // pred_fallthru
      _
    // Predicated region
    $region22: #{linear_forward.1} parent=1 // pred_check
      _
    $region23: #{linear_forward.1} parent=1 // pred_check_branch
      %133 = sbr.rel (0) target = $region25
    $region24: #{linear_forward.1} parent=1 // pred_region
      %134 = dma.done [#allocation4], 128
    $region25: #{linear_forward.1} parent=1 // pred_fallthru
      _
    %135 = vsyncpa [#allocation3], 1
    %136 = vsyncpa [#allocation6], 1
    %137 = vsyncpa [#allocation4], 1

</llo_original>
